<compile_context>
chip_gen: v5e
topology: v5e:2x2
jax: 0.10.0
libtpu: 0.0.40
codegen_flags: <defaults>
</compile_context>

<pallas_src>
import functools

import numpy as np
import jax
import jax.numpy as jnp
from jax.experimental import pallas as pl
from jax.experimental.pallas import tpu as pltpu


def _round_up(x, m):
    return ((x + m - 1) // m) * m


def _pad_axis(x, axis, new_size):
    pad = new_size - x.shape[axis]
    if pad == 0:
        return x
    widths = [(0, 0)] * x.ndim
    widths[axis] = (0, pad)
    return jnp.pad(x, widths)


def _as_dtype(x, dt):
    return x if x.dtype == dt else x.astype(dt)


# ---------------------------------------------------------------------------
# Kernel 1: per-relation node transform  HW[r] = H @ W[r]
# (negligible flops vs the aggregation; computed once, not per dst tile)
# ---------------------------------------------------------------------------
def _transform_kernel(h_ref, w_ref, hw_ref):
    hw_ref[0] = jnp.dot(
        h_ref[...], w_ref[0], preferred_element_type=jnp.float32
    ).astype(hw_ref.dtype)


def _node_transform(h, w, *, tile_n, out_dtype, vmem_limit_bytes):
    # h: (N_pad, F_in_pad)   w: (R, F_in_pad, F_out_pad)
    n_pad, f_in = h.shape
    r, _, f_out = w.shape
    return pl.pallas_call(
        _transform_kernel,
        out_shape=jax.ShapeDtypeStruct((r, n_pad, f_out), out_dtype),
        grid_spec=pltpu.PrefetchScalarGridSpec(
            num_scalar_prefetch=0,
            grid=(r, n_pad // tile_n),
            in_specs=[
                pl.BlockSpec((tile_n, f_in), lambda ri, ni: (ni, 0)),       # H
                pl.BlockSpec((1, f_in, f_out), lambda ri, ni: (ri, 0, 0)),  # W[r]
            ],
            out_specs=pl.BlockSpec((1, tile_n, f_out),
                                   lambda ri, ni: (ri, ni, 0)),
        ),
        compiler_params=pltpu.CompilerParams(
            dimension_semantics=("parallel", "parallel"),
            vmem_limit_bytes=vmem_limit_bytes),
    )(h, w)


# ---------------------------------------------------------------------------
# Kernel 2: block-sparse tiled aggregation
#   out[d,:] = sum over scheduled nonzero blocks of  A[r,d,s] @ HW[r,s,:]
# grid = (dst_tile i [parallel], schedule step t [arbitrary]); the output
# block is resident across t, accumulated in f32, finalized at the last step.
# ---------------------------------------------------------------------------
def _agg_kernel(nvalid_ref, rel_ref, src_ref, a_ref, hw_ref, b_ref, o_ref,
                *, use_bias, use_relu):
    del rel_ref, src_ref  # consumed by the index_maps only
    i = pl.program_id(0)
    t = pl.program_id(1)

    @pl.when(t == 0)
    def _():
        o_ref[...] = jnp.zeros_like(o_ref)

    # Only accumulate for the valid (nonzero) blocks of this dst tile; padded
    # schedule entries re-point at the previous block (no DMA) and are skipped.
    @pl.when(t < nvalid_ref[i])
    def _():
        # (tm, tk) bf16 x (tk, F_out) bf16 -> f32 on the MXU
        o_ref[...] += jnp.dot(a_ref[0], hw_ref[0],
                              preferred_element_type=jnp.float32)

    @pl.when(t == pl.num_programs(1) - 1)
    def _():
        out = o_ref[...]
        if use_bias:
            out = out + b_ref[...]
        if use_relu:
            out = jnp.maximum(out, 0.0)
        o_ref[...] = out


def _aggregate(adj, hw, bias, nvalid, rel_sched, src_sched, *, tm, tk,
               use_bias, use_relu, vmem_limit_bytes):
    r, n_dst, n_src = adj.shape
    f_out = hw.shape[-1]
    n_i = n_dst // tm
    max_steps = rel_sched.shape[1]
    kernel = functools.partial(_agg_kernel, use_bias=use_bias,
                               use_relu=use_relu)
    return pl.pallas_call(
        kernel,
        out_shape=jax.ShapeDtypeStruct((n_dst, f_out), jnp.float32),
        grid_spec=pltpu.PrefetchScalarGridSpec(
            num_scalar_prefetch=3,          # nvalid, rel_sched, src_sched
            grid=(n_i, max_steps),
            in_specs=[
                # A[rel, dst-tile, src-block]  (data-dependent rel/src block)
                pl.BlockSpec((1, tm, tk),
                             lambda i, t, nv, rs, ss: (rs[i, t], i, ss[i, t])),
                # HW[rel, src-block, :]
                pl.BlockSpec((1, tk, f_out),
                             lambda i, t, nv, rs, ss: (rs[i, t], ss[i, t], 0)),
                # bias (broadcast)
                pl.BlockSpec((1, f_out), lambda i, t, nv, rs, ss: (0, 0)),
            ],
            out_specs=pl.BlockSpec((tm, f_out),
                                   lambda i, t, nv, rs, ss: (i, 0)),
        ),
        compiler_params=pltpu.CompilerParams(
            dimension_semantics=("parallel", "arbitrary"),
            vmem_limit_bytes=vmem_limit_bytes),
    )(nvalid, rel_sched, src_sched, adj, hw, bias)


def _build_block_schedule(adj_p, tm, tk):
    """Host-side per-dst-tile list of nonzero (relation, src-block) pairs."""
    r, nd, ns = adj_p.shape
    n_i, n_k = nd // tm, ns // tk
    try:
        blk = np.asarray(
            jnp.any(adj_p.reshape(r, n_i, tm, n_k, tk) != 0, axis=(2, 4)))
    except Exception:
        # adj is a tracer (inside jit): fall back to the dense schedule.
        blk = np.ones((r, n_i, n_k), dtype=bool)

    per_tile = []
    for i in range(n_i):
        ent = [(rr, kk) for rr in range(r) for kk in range(n_k)
               if blk[rr, i, kk]]
        per_tile.append(ent)
    max_steps = max(1, max(len(e) for e in per_tile))

    nvalid = np.zeros((n_i,), np.int32)
    rel_s = np.zeros((n_i, max_steps), np.int32)
    src_s = np.zeros((n_i, max_steps), np.int32)
    for i, ent in enumerate(per_tile):
        nvalid[i] = len(ent)
        for t, (rr, kk) in enumerate(ent):
            rel_s[i, t], src_s[i, t] = rr, kk
        # Padded entries repeat the last valid block so the pipeline sees an
        # unchanged block index and issues no DMA for them.
        last = ent[-1] if ent else (0, 0)
        for t in range(len(ent), max_steps):
            rel_s[i, t], src_s[i, t] = last
    return (jnp.asarray(nvalid), jnp.asarray(rel_s), jnp.asarray(src_s))


# ---------------------------------------------------------------------------
# Wrapper: basis decomposition (glue), minimal padding, kernel launches.
# ---------------------------------------------------------------------------
def rgcn_layer(adj, h, weight, w_comp, bias, *, num_rels, num_bases,
               in_feat, out_feat, use_bias=True, activation="relu",
               compute_dtype=jnp.bfloat16,
               tile_m=1024, tile_k=2048, transform_tile=512):
    # ---- basis decomposition: mirrors the PyTorch .view/.matmul exactly.
    # NOTE: viewing a (num_bases, in_feat, out_feat) tensor as
    # (in_feat, num_bases, out_feat) is a raw reshape that interleaves the
    # basis/feature axes -- intentionally identical to the reference module
    # (inherited behavior, not a Pallas artifact).
    if num_bases < num_rels:
        w = weight.reshape(in_feat, num_bases, out_feat)
        w = jnp.matmul(w_comp, w)                        # (F_in, R, F_out)
        w = w.reshape(num_rels, in_feat, out_feat)
    else:
        w = weight

    n = h.shape[0]
    assert adj.shape == (num_rels, n, n)

    # ---- lane/sublane-minimal padding + tile selection ---------------------
    f_in_p = _round_up(in_feat, 128)
    f_out_p = _round_up(out_feat, 128)

    # dst: pad to multiple of 8 only; pick tm (mult of 8, divides n_dst_p),
    # capped so there are >= 2 dst blocks whenever possible (v7x megacore).
    n_dst_p = _round_up(n, 8)
    tm_cap = min(tile_m, n_dst_p)
    if n_dst_p >= 16:
        tm_cap = min(tm_cap, _round_up(n_dst_p // 2, 8))
    tm = max(8, tm_cap - tm_cap % 8)
    while n_dst_p % tm:
        tm -= 8

    # src: pad to multiple of 128 only; pick tk (mult of 128, divides n_src_p).
    n_src_p = _round_up(n, 128)
    tk = min(tile_k, n_src_p)
    tk = max(128, tk - tk % 128)
    while n_src_p % tk:
        tk -= 128

    # transform tile decoupled from tk (mult of 8, divides n_src_p).
    tn1 = min(transform_tile, n_src_p)
    tn1 = max(8, tn1 - tn1 % 8)
    while n_src_p % tn1:
        tn1 -= 8

    # ---- operand prep (casts / pads are no-ops when already conforming) ----
    h_p = _as_dtype(_pad_axis(_pad_axis(h, 1, f_in_p), 0, n_src_p),
                    compute_dtype)
    w_p = _as_dtype(_pad_axis(_pad_axis(w, 1, f_in_p), 2, f_out_p),
                    compute_dtype)
    # A is the dominant array: avoid an extra HBM pass if it is already the
    # compute dtype and already (8,128)-aligned.
    adj_p = _as_dtype(_pad_axis(_pad_axis(adj, 1, n_dst_p), 2, n_src_p),
                      compute_dtype)
    if use_bias and bias is not None:
        bias_p = _pad_axis(bias.reshape(1, out_feat), 1,
                           f_out_p).astype(jnp.float32)
    else:
        bias_p = jnp.zeros((1, f_out_p), jnp.float32)

    # ---- VMEM budgets (explicit so v5e's small default scoped window and
    #      v7x's 64 MiB physical VMEM are both respected) ---------------------
    isz = jnp.dtype(compute_dtype).itemsize
    vmem_t = 2 * (tn1 * f_in_p * isz + f_in_p * f_out_p * isz
                  + tn1 * f_out_p * isz)
    vmem_t = int(vmem_t * 1.4) + (1 << 20)
    vmem_a = 2 * (tm * tk * isz + tk * f_out_p * isz + tm * f_out_p * 4) \
        + f_out_p * 4
    vmem_a = int(vmem_a * 1.4) + (1 << 20)

    # ---- kernels ------------------------------------------------------------
    hw = _node_transform(h_p, w_p, tile_n=tn1, out_dtype=compute_dtype,
                         vmem_limit_bytes=vmem_t)
    nvalid, rel_sched, src_sched = _build_block_schedule(adj_p, tm, tk)
    out_p = _aggregate(adj_p, hw, bias_p, nvalid, rel_sched, src_sched,
                       tm=tm, tk=tk, use_bias=use_bias,
                       use_relu=(activation == "relu"),
                       vmem_limit_bytes=vmem_a)
    return out_p[:n, :out_feat]


if __name__ == "__main__":
    # Small deterministic problem (non-128 feature dims exercise padding path)
    N = 64          # nodes
    IN_FEAT = 48
    OUT_FEAT = 64
    NUM_RELS = 4
    NUM_BASES = 2   # < NUM_RELS -> exercises the basis-decomposition branch

    key = jax.random.PRNGKey(0)
    k_h, k_w, k_c, k_b, k_m, k_n = jax.random.split(key, 6)

    # node features
    h = jax.random.normal(k_h, (N, IN_FEAT), dtype=jnp.float32)

    # parameters (deterministic synthetic init; shapes match nn.Parameter defs)
    weight = jax.random.normal(k_w, (NUM_BASES, IN_FEAT, OUT_FEAT),
                               dtype=jnp.float32) * 0.1
    w_comp = jax.random.normal(k_c, (NUM_RELS, NUM_BASES),
                               dtype=jnp.float32) * 0.1
    bias = jax.random.normal(k_b, (OUT_FEAT,), dtype=jnp.float32) * 0.1

    # graph: per-relation dense adjacency, entries are edge norms.
    # Pre-cast A to the compute dtype once (it is reused across layers); the
    # wrapper then performs no extra cast pass over the dominant array.
    mask = (jax.random.uniform(k_m, (NUM_RELS, N, N)) < 0.1).astype(jnp.float32)
    norm = jax.random.uniform(k_n, (NUM_RELS, N, N), dtype=jnp.float32)
    adj = (mask * norm).astype(jnp.bfloat16)            # A[r, dst, src]

    out = rgcn_layer(adj, h, weight, w_comp, bias,
                     num_rels=NUM_RELS, num_bases=NUM_BASES,
                     in_feat=IN_FEAT, out_feat=OUT_FEAT)
    out = jax.block_until_ready(out)

    # pure-JAX reference with identical semantics (mirrors the kernel's bf16
    # quantization of the streamed operands; accumulation in f32)
    w_ref = jnp.matmul(w_comp, weight.reshape(IN_FEAT, NUM_BASES, OUT_FEAT))
    w_ref = w_ref.reshape(NUM_RELS, IN_FEAT, OUT_FEAT)
    hw_ref = jnp.einsum('nf,rfo->rno',
                        h.astype(jnp.bfloat16), w_ref.astype(jnp.bfloat16),
                        preferred_element_type=jnp.float32).astype(jnp.bfloat16)
    agg = jnp.einsum('rds,rso->do', adj, hw_ref,
                     preferred_element_type=jnp.float32)
    ref = jnp.maximum(agg + bias[None, :], 0.0)

    assert out.shape == (N, OUT_FEAT)
    err = float(jnp.max(jnp.abs(out - ref)))
    assert jnp.allclose(out, ref, atol=1e-2, rtol=1e-2), f"max abs err {err}"
    print("KERNEL_OK")
</pallas_src>

<mosaic_0001>
module attributes {stable_mosaic.version = 11 : i64} {
  func.func @_transform_kernel(%arg0: i32, %arg1: i32, %arg2: memref<128x128xbf16, #tpu.memory_space<vmem>>, %arg3: memref<1x128x128xbf16, #tpu.memory_space<vmem>>, %arg4: memref<1x128x128xbf16, #tpu.memory_space<vmem>>) attributes {dimension_semantics = [#tpu.dimension_semantics<parallel>, #tpu.dimension_semantics<parallel>], iteration_bounds = array<i64: 4, 1>, scalar_prefetch = 0 : i64, scratch_operands = 0 : i64, tpu.core_type = #tpu.core_type<tc>, window_params = [{transform_indices = @transform_0, window_bounds = array<i64: 128, 128>}, {transform_indices = @transform_1, window_bounds = array<i64: 1, 128, 128>}, {transform_indices = @transform_2, window_bounds = array<i64: 1, 128, 128>}]} {
    %c0 = arith.constant 0 : index
    %c0_0 = arith.constant 0 : index
    %0 = vector.load %arg2[%c0, %c0_0] : memref<128x128xbf16, #tpu.memory_space<vmem>>, vector<128x128xbf16>
    %c0_1 = arith.constant 0 : index
    %c0_2 = arith.constant 0 : index
    %c0_3 = arith.constant 0 : index
    %1 = vector.load %arg3[%c0_1, %c0_2, %c0_3] : memref<1x128x128xbf16, #tpu.memory_space<vmem>>, vector<1x128x128xbf16>
    %2 = vector.shape_cast %1 : vector<1x128x128xbf16> to vector<128x128xbf16>
    %cst = arith.constant dense<0.000000e+00> : vector<128x128xf32>
    %3 = tpu.matmul %0, %2, %cst {dimension_numbers = #tpu.dot_dimension_numbers<[1], [0], [0], [1], [0, 0, 1, 1], [], []>} : vector<128x128xbf16>, vector<128x128xbf16>, vector<128x128xf32> -> vector<128x128xf32>
    %4 = arith.truncf %3 : vector<128x128xf32> to vector<128x128xbf16>
    %c0_4 = arith.constant 0 : index
    %c0_5 = arith.constant 0 : index
    %c0_6 = arith.constant 0 : index
    %5 = vector.load %arg4[%c0_4, %c0_5, %c0_6] : memref<1x128x128xbf16, #tpu.memory_space<vmem>>, vector<1x128x128xbf16>
    %6 = vector.shape_cast %5 : vector<1x128x128xbf16> to vector<128x128xbf16>
    %7 = vector.shape_cast %4 : vector<128x128xbf16> to vector<1x128x128xbf16>
    tpu.vector_store %arg4[%c0_4, %c0_5, %c0_6], %7 {strides = array<i32>} : memref<1x128x128xbf16, #tpu.memory_space<vmem>>, vector<1x128x128xbf16>,
    return
  }
  func.func @transform_0(%arg0: i32, %arg1: i32) -> (i32, i32) {
    %c0_i32 = arith.constant 0 : i32
    %c0_i32_0 = arith.constant 0 : i32
    return %arg1, %c0_i32 : i32, i32
  }
  func.func @transform_1(%arg0: i32, %arg1: i32) -> (i32, i32, i32) {
    %c0_i32 = arith.constant 0 : i32
    %c0_i32_0 = arith.constant 0 : i32
    %c0_i32_1 = arith.constant 0 : i32
    return %arg0, %c0_i32, %c0_i32_0 : i32, i32, i32
  }
  func.func @transform_2(%arg0: i32, %arg1: i32) -> (i32, i32, i32) {
    %c0_i32 = arith.constant 0 : i32
    %c0_i32_0 = arith.constant 0 : i32
    return %arg0, %arg1, %c0_i32 : i32, i32, i32
  }
}

</mosaic_0001>

<llo_original>
// kernel: tpu_custom_call.1
$region0: #{tpu_custom_call.1}
  #allocation0 [shape = 'u32[]', space=smem, size = 0x4, offset = 0x4, fixed_abs, tag = 'smem constant byte address 0x4 - core index']
  #allocation1 [shape = 'u32[72,128]{1,0:T(1,128)}', space=vmem, size = 0x9000, scoped, tag = 'internal scratch']
  %s0 = inlined_call_operand.hbm [shape: bf16[128,128], index: 0, kind: input, shape index: {}]
  %s1 = inlined_call_operand.hbm [shape: bf16[4,128,128], index: 1, kind: input, shape index: {}]
  %s2 = inlined_call_operand.hbm [shape: bf16[4,128,128], index: 2, kind: output, shape index: {}]
  %s3 = sld [smem:[#allocation0]]
  $region49: #{tpu_custom_call.1} parent=0
    _
  %s5 = ssub.s32 1, %s3
  %s6 = scalar_select 0, %s5, %s3
  $region1: #{tpu_custom_call.1} parent=0
    #allocation2 [shape = 'u8[32768]{0}', space=vmem, size = 0x8000, scoped, tag = 'input window, operand 0, single buffered']
    #allocation3 [shape = 's32[2]{0}', space=sflag, size = 0x8, scoped, tag = 'scoped memory for tpu_custom_call.1']
    #allocation4 [shape = 's32[2]{0}', space=sflag, size = 0x8, scoped, tag = 'scoped memory for tpu_custom_call.1']
    #allocation5 [shape = 'u8[65536]{0}', space=vmem, size = 0x10000, scoped, tag = 'input window, operand 1']
    #allocation6 [shape = 's32[2]{0}', space=sflag, size = 0x8, scoped, tag = 'scoped memory for tpu_custom_call.1']
    #allocation7 [shape = 'u8[65536]{0}', space=vmem, size = 0x10000, scoped, tag = 'output window, operand 0']
    %7 = vsyncpa [#allocation3], 0
    %8 = vsyncpa [#allocation6], 0
    %s9 = scalar_lea.sflag [#allocation6], 1
    %10 = vsyncpa %s9, 0
    %11 = vsyncpa [#allocation4], 0
    %s12 = scalar_lea.sflag [#allocation4], 1
    %13 = vsyncpa %s12, 0
    loop: start=0, step=1, limit=6
    $region2: #{tpu_custom_call.1} parent=1 // loop_pre_header
      _
    $region3: #{tpu_custom_call.1} parent=1 // loop_header
      %s15 = sphi 0, %s19
      %p16 = scmp.ge.s32.totalorder %s15, 6
      %s22 = sphi 0, %s34
      %s23 = sphi 0, %s30
      %s24 = sphi 0, %s22
      %s25 = sphi 0, %s23
      %s26 = sphi 0, %s24
      %s27 = sphi 0, %s25
      %s37 = sphi 0, %s39
      %s40 = sphi 0, %s37
      %s41 = sphi 0, %s40
      %s57 = sphi 0, %s41
      %s63 = sphi 0, %s65
      %s66 = sphi 0, %s63
      %s67 = sphi 0, %s66
      %s83 = sphi 0, %s67
      %s91 = sphi 0, %s93
      %s94 = sphi 0, %s91
      %s95 = sphi 0, %s94
      %s111 = sphi 0, %s95
    $region4: #{tpu_custom_call.1} parent=1 // loop_header_branch
      %18 = sbr.rel (%p16) target = $region8
    $region5: #{tpu_custom_call.1} parent=1 // loop_body
      %s20 = ssub.s32 %s15, 1
      %s21 = ssub.s32 %s15, 2
      %s28 = sadd.s32 1, %s23
      %p29 = scmp.ge.s32.totalorder %s28, 1
      %s30 = scalar_select %p29, 0, %s28
      %s31 = sadd.s32 1, %s22
      %s32 = scalar_select %p29, %s31, %s22
      %p33 = scmp.ge.s32.totalorder %s32, 4
      %s34 = scalar_select %p33, 0, %s32
      %s35 = ssub.s32 %s23, %s30
      %p36 = scmp.eq.s32.totalorder %s35, 0
      %s38 = sadd.s32 %s37, 1
      %s39 = scalar_select %p36, %s37, %s38
      %p42 = pneg %p36
      %p43 = scmp.eq.s32.totalorder %s15, 3
      %p44 = por %p42, %p43
      %p45 = scmp.ne.s32.totalorder %s37, %s40
      %p46 = scmp.eq.s32.totalorder %s15, 0
      %p47 = por %p45, %p46
      %p48 = scmp.ne.s32.totalorder %s37, %s40
      %p49 = scmp.eq.s32.totalorder %s20, 3
      %p50 = por %p48, %p49
      %p51 = scmp.ne.s32.totalorder %s40, %s41
      %p52 = scmp.eq.s32.totalorder %s20, 0
      %p53 = por %p51, %p52
      %p54 = scmp.ne.s32.totalorder %s40, %s41
      %p55 = scmp.eq.s32.totalorder %s21, 3
      %p56 = por %p54, %p55
      %p58 = scmp.ne.s32.totalorder %s41, %s57
      %p59 = scmp.eq.s32.totalorder %s21, 0
      %p60 = por %p58, %p59
      %s61 = ssub.s32 %s22, %s34
      %p62 = scmp.eq.s32.totalorder %s61, 0
      %s64 = sadd.s32 %s63, 1
      %s65 = scalar_select %p62, %s63, %s64
      %p68 = pneg %p62
      %p69 = scmp.eq.s32.totalorder %s15, 3
      %p70 = por %p68, %p69
      %p71 = scmp.ne.s32.totalorder %s63, %s66
      %p72 = scmp.eq.s32.totalorder %s15, 0
      %p73 = por %p71, %p72
      %p74 = scmp.ne.s32.totalorder %s63, %s66
      %p75 = scmp.eq.s32.totalorder %s20, 3
      %p76 = por %p74, %p75
      %p77 = scmp.ne.s32.totalorder %s66, %s67
      %p78 = scmp.eq.s32.totalorder %s20, 0
      %p79 = por %p77, %p78
      %p80 = scmp.ne.s32.totalorder %s66, %s67
      %p81 = scmp.eq.s32.totalorder %s21, 3
      %p82 = por %p80, %p81
      %p84 = scmp.ne.s32.totalorder %s67, %s83
      %p85 = scmp.eq.s32.totalorder %s21, 0
      %p86 = por %p84, %p85
      %s87 = ssub.s32 %s22, %s34
      %s88 = ssub.s32 %s23, %s30
      %s89 = sor.u32 %s87, %s88
      %p90 = scmp.eq.s32.totalorder %s89, 0
      %s92 = sadd.s32 %s91, 1
      %s93 = scalar_select %p90, %s91, %s92
      %p96 = pneg %p90
      %p97 = scmp.eq.s32.totalorder %s15, 3
      %p98 = por %p96, %p97
      %p99 = scmp.ne.s32.totalorder %s91, %s94
      %p100 = scmp.eq.s32.totalorder %s15, 0
      %p101 = por %p99, %p100
      %p102 = scmp.ne.s32.totalorder %s91, %s94
      %p103 = scmp.eq.s32.totalorder %s20, 3
      %p104 = por %p102, %p103
      %p105 = scmp.ne.s32.totalorder %s94, %s95
      %p106 = scmp.eq.s32.totalorder %s20, 0
      %p107 = por %p105, %p106
      %p108 = scmp.ne.s32.totalorder %s94, %s95
      %p109 = scmp.eq.s32.totalorder %s21, 3
      %p110 = por %p108, %p109
      %p112 = scmp.ne.s32.totalorder %s95, %s111
      %p113 = scmp.eq.s32.totalorder %s21, 0
      %p114 = por %p112, %p113
      %p115 = scmp.le.s32.totalorder 1, %s15
      %p116 = scmp.lt.s32.totalorder %s15, 5
      %p117 = pnand %p115, %p116
      %p118 = pneg %p117
      // Predicated region
      $region9: #{tpu_custom_call.1} parent=5 // pred_check
        _
      $region10: #{tpu_custom_call.1} parent=5 // pred_check_branch
        %120 = sbr.rel (%p117) target = $region12
      $region11: #{tpu_custom_call.1} parent=5 // pred_region
        %s121 = ssub.s32 %s15, 1
        // Predicated region
        $region13: #{tpu_custom_call.1} parent=11 // pred_check
          %p122 = pneg %p53
        $region14: #{tpu_custom_call.1} parent=11 // pred_check_branch
          %124 = sbr.rel (%p122) target = $region16
        $region15: #{tpu_custom_call.1} parent=11 // pred_region
          %s125 = smul.u32 16, %s25
          %127 = vsyncadd [#allocation3], 0
          %s128 = smul.addr %s125, 4
          %s129 = scalar_lea.hbm %s0, %s128
          %s130 = sshll.u32 %s129, 4
          %s131 = int_to_ptr.hbm [resolvable:$true] %s130
          %s132 = sshll.u32 [#allocation2], 4
          %s133 = int_to_ptr.vmem [resolvable:$true] %s132
          %138 = dma.hbm_to_vmem [thread:$0]  %s131, 1024, %s133, [#allocation3], 64, 64, 4
        $region16: #{tpu_custom_call.1} parent=11 // pred_fallthru
          _
      $region12: #{tpu_custom_call.1} parent=5 // pred_fallthru
        _
      %p139 = scmp.lt.s32.totalorder %s15, 4
      // Predicated region
      $region17: #{tpu_custom_call.1} parent=5 // pred_check
        %p140 = pneg %p139
      $region18: #{tpu_custom_call.1} parent=5 // pred_check_branch
        %142 = sbr.rel (%p140) target = $region20
      $region19: #{tpu_custom_call.1} parent=5 // pred_region
        // Predicated region
        $region21: #{tpu_custom_call.1} parent=19 // pred_check
          %p143 = pneg %p73
        $region22: #{tpu_custom_call.1} parent=19 // pred_check_branch
          %145 = sbr.rel (%p143) target = $region24
        $region23: #{tpu_custom_call.1} parent=19 // pred_region
          %s146 = sand.u32 %s63, 1
          %s147 = scalar_lea.sflag [#allocation6], %s146
          %s148 = sand.u32 %s63, 1
          %s149 = smul.addr %s148, 64
          %s150 = scalar_lea.vmem [#allocation5], %s149
          %152 = vsyncadd %s147, 0
          %s153 = smul.addr %s22, 16
          %s154 = smul.addr %s153, 4
          %s155 = scalar_lea.hbm %s1, %s154
          %s156 = sshll.u32 %s155, 4
          %s157 = int_to_ptr.hbm [resolvable:$true] %s156
          %s158 = sshll.u32 %s150, 4
          %s159 = int_to_ptr.vmem [resolvable:$true] %s158
          %164 = dma.hbm_to_vmem [thread:$0]  %s157, 1024, %s159, %s147, 64, 64, 4
        $region24: #{tpu_custom_call.1} parent=19 // pred_fallthru
          _
      $region20: #{tpu_custom_call.1} parent=5 // pred_fallthru
        _
      %p165 = scmp.le.s32.totalorder 1, %s15
      %p166 = scmp.lt.s32.totalorder %s15, 5
      %p167 = pnand %p165, %p166
      %p168 = pneg %p167
      // Predicated region
      $region25: #{tpu_custom_call.1} parent=5 // pred_check
        _
      $region26: #{tpu_custom_call.1} parent=5 // pred_check_branch
        %170 = sbr.rel (%p167) target = $region28
      $region27: #{tpu_custom_call.1} parent=5 // pred_region
        %s171 = ssub.s32 %s15, 1
        // Predicated region
        $region29: #{tpu_custom_call.1} parent=27 // pred_check
          %p172 = pneg %p53
        $region30: #{tpu_custom_call.1} parent=27 // pred_check_branch
          %174 = sbr.rel (%p172) target = $region32
        $region31: #{tpu_custom_call.1} parent=27 // pred_region
          %176 = dma.done [#allocation3], 1024
        $region32: #{tpu_custom_call.1} parent=27 // pred_fallthru
          _
        %s177 = sand.u32 %s66, 1
        %s178 = scalar_lea.sflag [#allocation6], %s177
        %s179 = sand.u32 %s66, 1
        %s180 = smul.addr %s179, 64
        %s181 = scalar_lea.vmem [#allocation5], %s180
        // Predicated region
        $region33: #{tpu_custom_call.1} parent=27 // pred_check
          %p182 = pneg %p79
        $region34: #{tpu_custom_call.1} parent=27 // pred_check_branch
          %184 = sbr.rel (%p182) target = $region36
        $region35: #{tpu_custom_call.1} parent=27 // pred_region
          %186 = dma.done %s178, 1024
        $region36: #{tpu_custom_call.1} parent=27 // pred_fallthru
          _
        %p187 = pneg %p53
        %p188 = pneg %p50
        %s189 = sand.u32 %s66, 1
        %s190 = scalar_lea.sflag [#allocation6], %s189
        %s191 = sand.u32 %s66, 1
        %s192 = smul.addr %s191, 64
        %s193 = scalar_lea.vmem [#allocation5], %s192
        %p194 = pneg %p79
        %p195 = pneg %p76
        %p196 = pneg %p107
        %p197 = pneg %p104
        %s198 = sand.u32 %s94, 1
        %s199 = scalar_lea.sflag [#allocation4], %s198
        %s200 = sand.u32 %s94, 1
        %s201 = smul.addr %s200, 64
        %s202 = scalar_lea.vmem [#allocation7], %s201
        %s203 = smul.u32 16, %s25
        %s204 = smul.u32 16, %s25
        %v205 = vld [vmem:[#allocation2] sm:$0xf]
        %v206 = vld [vmem:[#allocation2 + $0x4] sm:$0xf]
        %v207 = vld [vmem:[#allocation2 + $0x8] sm:$0xf]
        %v208 = vld [vmem:[#allocation2 + $0xc] sm:$0xf]
        %v209 = vld [vmem:[#allocation2 + $0x10] sm:$0xf]
        %v210 = vld [vmem:[#allocation2 + $0x14] sm:$0xf]
        %v211 = vld [vmem:[#allocation2 + $0x18] sm:$0xf]
        %v212 = vld [vmem:[#allocation2 + $0x1c] sm:$0xf]
        %v213 = vld [vmem:[#allocation2 + $0x20] sm:$0xf]
        %v214 = vld [vmem:[#allocation2 + $0x24] sm:$0xf]
        %v215 = vld [vmem:[#allocation2 + $0x28] sm:$0xf]
        %v216 = vld [vmem:[#allocation2 + $0x2c] sm:$0xf]
        %v217 = vld [vmem:[#allocation2 + $0x30] sm:$0xf]
        %v218 = vld [vmem:[#allocation2 + $0x34] sm:$0xf]
        %v219 = vld [vmem:[#allocation2 + $0x38] sm:$0xf]
        %v220 = vld [vmem:[#allocation2 + $0x3c] sm:$0xf]
        %v221 = vld [vmem:[%s181] sm:$0xf]
        %v222 = vld [vmem:[%s181 + $0x4] sm:$0xf]
        %v223 = vld [vmem:[%s181 + $0x8] sm:$0xf]
        %v224 = vld [vmem:[%s181 + $0xc] sm:$0xf]
        %v225 = vld [vmem:[%s181 + $0x10] sm:$0xf]
        %v226 = vld [vmem:[%s181 + $0x14] sm:$0xf]
        %v227 = vld [vmem:[%s181 + $0x18] sm:$0xf]
        %v228 = vld [vmem:[%s181 + $0x1c] sm:$0xf]
        %v229 = vld [vmem:[%s181 + $0x20] sm:$0xf]
        %v230 = vld [vmem:[%s181 + $0x24] sm:$0xf]
        %v231 = vld [vmem:[%s181 + $0x28] sm:$0xf]
        %v232 = vld [vmem:[%s181 + $0x2c] sm:$0xf]
        %v233 = vld [vmem:[%s181 + $0x30] sm:$0xf]
        %v234 = vld [vmem:[%s181 + $0x34] sm:$0xf]
        %v235 = vld [vmem:[%s181 + $0x38] sm:$0xf]
        %v236 = vld [vmem:[%s181 + $0x3c] sm:$0xf]
        %v253 = vunpack.c.l.b16 %v205
        %v254 = vunpack.c.l.b16 %v206
        %v255 = vunpack.c.l.b16 %v207
        %v256 = vunpack.c.l.b16 %v208
        %v257 = vunpack.c.l.b16 %v209
        %v258 = vunpack.c.l.b16 %v210
        %v259 = vunpack.c.l.b16 %v211
        %v260 = vunpack.c.l.b16 %v212
        %v261 = vunpack.c.l.b16 %v213
        %v262 = vunpack.c.l.b16 %v214
        %v263 = vunpack.c.l.b16 %v215
        %v264 = vunpack.c.l.b16 %v216
        %v265 = vunpack.c.l.b16 %v217
        %v266 = vunpack.c.l.b16 %v218
        %v267 = vunpack.c.l.b16 %v219
        %v268 = vunpack.c.l.b16 %v220
        %v269 = vpack.c.b16 %v254, %v253
        %v270 = vpack.c.b16 %v256, %v255
        %v271 = vpack.c.b16 %v258, %v257
        %v272 = vpack.c.b16 %v260, %v259
        %v273 = vpack.c.b16 %v262, %v261
        %v274 = vpack.c.b16 %v264, %v263
        %v275 = vpack.c.b16 %v266, %v265
        %v276 = vpack.c.b16 %v268, %v267
        %v301 = vunpack.c.l.b16 %v221
        %v302 = vunpack.c.l.b16 %v222
        %v303 = vunpack.c.l.b16 %v223
        %v304 = vunpack.c.l.b16 %v224
        %v305 = vunpack.c.l.b16 %v225
        %v306 = vunpack.c.l.b16 %v226
        %v307 = vunpack.c.l.b16 %v227
        %v308 = vunpack.c.l.b16 %v228
        %v309 = vunpack.c.l.b16 %v229
        %v310 = vunpack.c.l.b16 %v230
        %v311 = vunpack.c.l.b16 %v231
        %v312 = vunpack.c.l.b16 %v232
        %v313 = vunpack.c.l.b16 %v233
        %v314 = vunpack.c.l.b16 %v234
        %v315 = vunpack.c.l.b16 %v235
        %v316 = vunpack.c.l.b16 %v236
        %v317 = vpack.c.b16 %v302, %v301
        %v318 = vpack.c.b16 %v304, %v303
        %v319 = vpack.c.b16 %v306, %v305
        %v320 = vpack.c.b16 %v308, %v307
        %v321 = vpack.c.b16 %v310, %v309
        %v322 = vpack.c.b16 %v312, %v311
        %v323 = vpack.c.b16 %v314, %v313
        %v324 = vpack.c.b16 %v316, %v315
        %333 = vmatpush.bf16.msra.mxu0 %v324
        %334 = vmatpush.bf16.msra.mxu0 %v323
        %335 = vmatpush.bf16.msra.mxu0 %v322
        %336 = vmatpush.bf16.msra.mxu0 %v321
        %337 = vmatpush.bf16.msra.mxu0 %v320
        %338 = vmatpush.bf16.msra.mxu0 %v319
        %339 = vmatpush.bf16.msra.mxu0 %v318
        %340 = vmatpush.bf16.msra.mxu0 %v317
        %341 = vmatmul.bf16.gmra.mxu0 %v269
        %v342 = vpop.f32.mrf.mxu0
        %v343 = vadd.f32 0.0, %v342
        %v344 = vpop.f32.mrf.mxu0
        %v345 = vadd.f32 0.0, %v344
        %346 = vmatmul.bf16.gmra.mxu0 %v270
        %v347 = vpop.f32.mrf.mxu0
        %v348 = vadd.f32 0.0, %v347
        %v349 = vpop.f32.mrf.mxu0
        %v350 = vadd.f32 0.0, %v349
        %351 = vmatmul.bf16.gmra.mxu0 %v271
        %v352 = vpop.f32.mrf.mxu0
        %v353 = vadd.f32 0.0, %v352
        %v354 = vpop.f32.mrf.mxu0
        %v355 = vadd.f32 0.0, %v354
        %356 = vmatmul.bf16.gmra.mxu0 %v272
        %v357 = vpop.f32.mrf.mxu0
        %v358 = vadd.f32 0.0, %v357
        %v359 = vpop.f32.mrf.mxu0
        %v360 = vadd.f32 0.0, %v359
        %361 = vmatmul.bf16.gmra.mxu0 %v273
        %v362 = vpop.f32.mrf.mxu0
        %v363 = vadd.f32 0.0, %v362
        %v364 = vpop.f32.mrf.mxu0
        %v365 = vadd.f32 0.0, %v364
        %366 = vmatmul.bf16.gmra.mxu0 %v274
        %v367 = vpop.f32.mrf.mxu0
        %v368 = vadd.f32 0.0, %v367
        %v369 = vpop.f32.mrf.mxu0
        %v370 = vadd.f32 0.0, %v369
        %371 = vmatmul.bf16.gmra.mxu0 %v275
        %v372 = vpop.f32.mrf.mxu0
        %v373 = vadd.f32 0.0, %v372
        %v374 = vpop.f32.mrf.mxu0
        %v375 = vadd.f32 0.0, %v374
        %376 = vmatmul.bf16.gmra.mxu0 %v276
        %v377 = vpop.f32.mrf.mxu0
        %v378 = vadd.f32 0.0, %v377
        %v379 = vpop.f32.mrf.mxu0
        %v380 = vadd.f32 0.0, %v379
        %381 = vdwg.mxu0
        %v382 = vpack.c.bf16 %v343, %v343
        %v383 = vpack.c.bf16 %v345, %v345
        %v384 = vpack.c.bf16 %v348, %v348
        %v385 = vpack.c.bf16 %v350, %v350
        %v386 = vpack.c.bf16 %v353, %v353
        %v387 = vpack.c.bf16 %v355, %v355
        %v388 = vpack.c.bf16 %v358, %v358
        %v389 = vpack.c.bf16 %v360, %v360
        %v390 = vpack.c.bf16 %v363, %v363
        %v391 = vpack.c.bf16 %v365, %v365
        %v392 = vpack.c.bf16 %v368, %v368
        %v393 = vpack.c.bf16 %v370, %v370
        %v394 = vpack.c.bf16 %v373, %v373
        %v395 = vpack.c.bf16 %v375, %v375
        %v396 = vpack.c.bf16 %v378, %v378
        %v397 = vpack.c.bf16 %v380, %v380
        %398 = vst [vmem:[%s202] sm:$0xf] %v382
        %399 = vst [vmem:[%s202 + $0x4] sm:$0xf] %v383
        %400 = vst [vmem:[%s202 + $0x8] sm:$0xf] %v384
        %401 = vst [vmem:[%s202 + $0xc] sm:$0xf] %v385
        %402 = vst [vmem:[%s202 + $0x10] sm:$0xf] %v386
        %403 = vst [vmem:[%s202 + $0x14] sm:$0xf] %v387
        %404 = vst [vmem:[%s202 + $0x18] sm:$0xf] %v388
        %405 = vst [vmem:[%s202 + $0x1c] sm:$0xf] %v389
        %406 = vst [vmem:[%s202 + $0x20] sm:$0xf] %v390
        %407 = vst [vmem:[%s202 + $0x24] sm:$0xf] %v391
        %408 = vst [vmem:[%s202 + $0x28] sm:$0xf] %v392
        %409 = vst [vmem:[%s202 + $0x2c] sm:$0xf] %v393
        %410 = vst [vmem:[%s202 + $0x30] sm:$0xf] %v394
        %411 = vst [vmem:[%s202 + $0x34] sm:$0xf] %v395
        %412 = vst [vmem:[%s202 + $0x38] sm:$0xf] %v396
        %413 = vst [vmem:[%s202 + $0x3c] sm:$0xf] %v397
        %s414 = sand.u32 %s94, 1
        %s415 = scalar_lea.sflag [#allocation4], %s414
        %s416 = sand.u32 %s94, 1
        %s417 = smul.addr %s416, 64
        %s418 = scalar_lea.vmem [#allocation7], %s417
        // Predicated region
        $region37: #{tpu_custom_call.1} parent=27 // pred_check
          %p419 = pneg %p104
        $region38: #{tpu_custom_call.1} parent=27 // pred_check_branch
          %421 = sbr.rel (%p419) target = $region40
        $region39: #{tpu_custom_call.1} parent=27 // pred_region
          %s422 = smul.u32 16, %s25
          %424 = vsyncadd %s415, 0
          %s425 = smul.addr %s24, 16
          %s426 = sadd.s32 %s422, %s425
          %s427 = smul.addr %s426, 4
          %s428 = scalar_lea.hbm %s2, %s427
          %s429 = sshll.u32 %s418, 4
          %s430 = int_to_ptr.vmem [resolvable:$true] %s429
          %s431 = sshll.u32 %s428, 4
          %s432 = int_to_ptr.hbm [resolvable:$true] %s431
          %437 = dma.vmem_to_hbm [thread:$0]  %s430, 1024, %s432, %s415, 64, 64, 4
        $region40: #{tpu_custom_call.1} parent=27 // pred_fallthru
          _
      $region28: #{tpu_custom_call.1} parent=5 // pred_fallthru
        _
      %p438 = scmp.le.s32.totalorder 2, %s15
      // Predicated region
      $region41: #{tpu_custom_call.1} parent=5 // pred_check
        %p439 = pneg %p438
      $region42: #{tpu_custom_call.1} parent=5 // pred_check_branch
        %441 = sbr.rel (%p439) target = $region44
      $region43: #{tpu_custom_call.1} parent=5 // pred_region
        %s442 = ssub.s32 %s15, 2
        // Predicated region
        $region45: #{tpu_custom_call.1} parent=43 // pred_check
          %p443 = pneg %p110
        $region46: #{tpu_custom_call.1} parent=43 // pred_check_branch
          %445 = sbr.rel (%p443) target = $region48
        $region47: #{tpu_custom_call.1} parent=43 // pred_region
          %s446 = sand.u32 %s95, 1
          %s447 = scalar_lea.sflag [#allocation4], %s446
          %s448 = sand.u32 %s95, 1
          %s449 = smul.addr %s448, 64
          %s450 = scalar_lea.vmem [#allocation7], %s449
          %452 = dma.done %s447, 1024
        $region48: #{tpu_custom_call.1} parent=43 // pred_fallthru
          _
      $region44: #{tpu_custom_call.1} parent=5 // pred_fallthru
        _
    $region6: #{tpu_custom_call.1} parent=1 // loop_footer
      %s19 = sadd.s32 1, %s15
    $region7: #{tpu_custom_call.1} parent=1 // loop_footer_branch
      %14 = sbr.rel target = $region3
    $region8: #{tpu_custom_call.1} parent=1 // loop_exit
      _
    %453 = vsyncpa [#allocation3], 1
    %s454 = scalar_lea.sflag [#allocation3], 1
    %455 = vsyncpa %s454, 1
    %456 = vsyncpa [#allocation6], 1
    %s457 = scalar_lea.sflag [#allocation6], 1
    %458 = vsyncpa %s457, 1
    %459 = vsyncpa [#allocation4], 1
    %s460 = scalar_lea.sflag [#allocation4], 1
    %461 = vsyncpa %s460, 1

</llo_original>
